<compile_context>
chip_gen: v5e
topology: v5e:2x2
jax: 0.10.0
libtpu: 0.0.40
codegen_flags: <defaults>
</compile_context>

<pallas_src>
import jax
import jax.numpy as jnp
from jax.experimental import pallas as pl
from jax.experimental.pallas import tpu as pltpu

IN_FEATURES = 3
OUT_FEATURES = 1

_LANE = 128        # f32 lane width: batch maps onto lanes
_SUBLANE = 8       # f32 sublane count: S-tiles must be a multiple of 8 (or full)
_S_TILE_MAX = 2048 # rows of 128 lanes per grid step -> 262,144 batch elems/step
                   # VMEM per step: in 3 MiB + out 1 MiB, ~8 MiB double-buffered


def _round_up(n, m):
    return ((n + m - 1) // m) * m


def _linear_kernel(x_ref, w_ref, b_ref, o_ref):
    """o = w0*x[0] + w1*x[1] + w2*x[2] + b, all operands dense (S_tile, 128).

    x_ref: VMEM (IN_FEATURES, S_tile, 128) f32  (batch index = s*128 + lane)
    w_ref: SMEM (IN_FEATURES,) f32              (flattened nn.Linear weight)
    b_ref: SMEM (OUT_FEATURES,) f32
    o_ref: VMEM (S_tile, 128) f32               (full-width, unmasked stores)
    """
    w0 = w_ref[0]
    w1 = w_ref[1]
    w2 = w_ref[2]
    b = b_ref[0]
    o_ref[...] = w0 * x_ref[0] + w1 * x_ref[1] + w2 * x_ref[2] + b


def linear_pallas(x, weight, bias):
    """y = x @ weight.T + bias  (PyTorch nn.Linear(3, 1) semantics).

    x:      (B, IN_FEATURES) float32
    weight: (OUT_FEATURES, IN_FEATURES) float32
    bias:   (OUT_FEATURES,) float32
    returns (B, OUT_FEATURES) float32
    """
    B = x.shape[0]

    # Pad batch only to the lane width (128), then split lanes into S rows.
    lanes = _round_up(max(B, 1), _LANE)
    S = lanes // _LANE

    # Balance tiles across grid steps; pad S minimally (to a multiple of 8 per
    # tile) instead of padding the batch to a whole huge tile.
    num_tiles = pl.cdiv(S, _S_TILE_MAX)
    if num_tiles == 1:
        s_tile = S          # block == full array dim: no sublane-divisibility need
        s_pad = S
    else:
        s_tile = _round_up(pl.cdiv(S, num_tiles), _SUBLANE)
        s_pad = num_tiles * s_tile
    b_pad = s_pad * _LANE

    # Feature-major, lane-dense slab: x_t[f, s, l] = x_padded[s*128 + l, f].
    x_t = jnp.pad(x, ((0, b_pad - B), (0, 0))).T.reshape(IN_FEATURES, s_pad, _LANE)

    y_t = pl.pallas_call(
        _linear_kernel,
        out_shape=jax.ShapeDtypeStruct((s_pad, _LANE), x.dtype),
        grid=(num_tiles,),
        in_specs=[
            # dense (3, S_tile, 128) input blocks tiled along S
            pl.BlockSpec((IN_FEATURES, s_tile, _LANE), lambda i: (0, i, 0)),
            # weight / bias live whole in SMEM as scalars
            pl.BlockSpec(memory_space=pltpu.MemorySpace.SMEM),
            pl.BlockSpec(memory_space=pltpu.MemorySpace.SMEM),
        ],
        out_specs=pl.BlockSpec((s_tile, _LANE), lambda i: (i, 0)),
        compiler_params=pltpu.CompilerParams(
            # batch tiles are independent -> shard across TensorCores (v7x)
            dimension_semantics=("parallel",),
        ),
        # memory-bound custom call: ~16 B of HBM traffic / row, ~6 flops / row
        cost_estimate=pl.CostEstimate(
            flops=6 * b_pad,
            transcendentals=0,
            bytes_accessed=(IN_FEATURES + OUT_FEATURES) * 4 * b_pad,
        ),
    )(x_t, weight.reshape(-1), bias)

    # batch index = s*128 + lane  ->  flatten, drop padding, restore (B, 1)
    return y_t.reshape(b_pad)[:B].reshape(B, OUT_FEATURES)


if __name__ == "__main__":
    key = jax.random.PRNGKey(0)
    kx, kw, kb, kx2 = jax.random.split(key, 4)

    # Deterministic parameter init (mimics nn.Linear's uniform(-1/sqrt(in), 1/sqrt(in)))
    bound = 1.0 / jnp.sqrt(jnp.float32(IN_FEATURES))
    weight = jax.random.uniform(
        kw, (OUT_FEATURES, IN_FEATURES), minval=-bound, maxval=bound, dtype=jnp.float32
    )
    bias = jax.random.uniform(
        kb, (OUT_FEATURES,), minval=-bound, maxval=bound, dtype=jnp.float32
    )

    # Primary check: small batch, matches the PyTorch forward.
    batch = 8
    x = jax.random.normal(kx, (batch, IN_FEATURES), dtype=jnp.float32)
    y = linear_pallas(x, weight, bias)
    jax.block_until_ready(y)
    y_ref = x @ weight.T + bias
    assert y.shape == (batch, OUT_FEATURES)
    assert jnp.allclose(y, y_ref, atol=1e-5), "mismatch vs reference (batch=8)"

    # Secondary check: batch not aligned to lane width -> exercises tail slicing.
    batch2 = 333
    x2 = jax.random.normal(kx2, (batch2, IN_FEATURES), dtype=jnp.float32)
    y2 = linear_pallas(x2, weight, bias)
    jax.block_until_ready(y2)
    y2_ref = x2 @ weight.T + bias
    assert y2.shape == (batch2, OUT_FEATURES)
    assert jnp.allclose(y2, y2_ref, atol=1e-5), "mismatch vs reference (batch=333)"

    print("KERNEL_OK")
</pallas_src>

<mosaic_0001>
module attributes {stable_mosaic.version = 11 : i64} {
  func.func @_linear_kernel(%arg0: i32, %arg1: memref<3x1x128xf32, #tpu.memory_space<vmem>>, %arg2: memref<3xf32, #tpu.memory_space<smem>>, %arg3: memref<1xf32, #tpu.memory_space<smem>>, %arg4: memref<1x128xf32, #tpu.memory_space<vmem>>) attributes {dimension_semantics = [#tpu.dimension_semantics<parallel>], iteration_bounds = array<i64: 1>, scalar_prefetch = 0 : i64, scratch_operands = 0 : i64, tpu.core_type = #tpu.core_type<tc>, window_params = [{transform_indices = @transform_0, window_bounds = array<i64: 3, 1, 128>}, {transform_indices = @transform_1, window_bounds = array<i64: 3>}, {transform_indices = @transform_2, window_bounds = array<i64: 1>}, {transform_indices = @transform_3, window_bounds = array<i64: 1, 128>}]} {
    %c0 = arith.constant 0 : index
    %0 = memref.load %arg2[%c0] : memref<3xf32, #tpu.memory_space<smem>>
    %c1 = arith.constant 1 : index
    %1 = memref.load %arg2[%c1] : memref<3xf32, #tpu.memory_space<smem>>
    %c2 = arith.constant 2 : index
    %2 = memref.load %arg2[%c2] : memref<3xf32, #tpu.memory_space<smem>>
    %c0_0 = arith.constant 0 : index
    %3 = memref.load %arg3[%c0_0] : memref<1xf32, #tpu.memory_space<smem>>
    %c0_1 = arith.constant 0 : index
    %c0_2 = arith.constant 0 : index
    %c0_3 = arith.constant 0 : index
    %4 = vector.load %arg1[%c0_1, %c0_2, %c0_3] : memref<3x1x128xf32, #tpu.memory_space<vmem>>, vector<1x1x128xf32>
    %5 = vector.shape_cast %4 : vector<1x1x128xf32> to vector<1x128xf32>
    %6 = vector.broadcast %0 : f32 to vector<1x128xf32>
    %7 = arith.mulf %6, %5 : vector<1x128xf32>
    %c1_4 = arith.constant 1 : index
    %c0_5 = arith.constant 0 : index
    %c0_6 = arith.constant 0 : index
    %8 = vector.load %arg1[%c1_4, %c0_5, %c0_6] : memref<3x1x128xf32, #tpu.memory_space<vmem>>, vector<1x1x128xf32>
    %9 = vector.shape_cast %8 : vector<1x1x128xf32> to vector<1x128xf32>
    %10 = vector.broadcast %1 : f32 to vector<1x128xf32>
    %11 = arith.mulf %10, %9 : vector<1x128xf32>
    %12 = arith.addf %7, %11 : vector<1x128xf32>
    %c2_7 = arith.constant 2 : index
    %c0_8 = arith.constant 0 : index
    %c0_9 = arith.constant 0 : index
    %13 = vector.load %arg1[%c2_7, %c0_8, %c0_9] : memref<3x1x128xf32, #tpu.memory_space<vmem>>, vector<1x1x128xf32>
    %14 = vector.shape_cast %13 : vector<1x1x128xf32> to vector<1x128xf32>
    %15 = vector.broadcast %2 : f32 to vector<1x128xf32>
    %16 = arith.mulf %15, %14 : vector<1x128xf32>
    %17 = arith.addf %12, %16 : vector<1x128xf32>
    %18 = vector.broadcast %3 : f32 to vector<1x128xf32>
    %19 = arith.addf %17, %18 : vector<1x128xf32>
    %c0_10 = arith.constant 0 : index
    %c0_11 = arith.constant 0 : index
    %20 = vector.load %arg4[%c0_10, %c0_11] : memref<1x128xf32, #tpu.memory_space<vmem>>, vector<1x128xf32>
    tpu.vector_store %arg4[%c0_10, %c0_11], %19 {strides = array<i32>} : memref<1x128xf32, #tpu.memory_space<vmem>>, vector<1x128xf32>,
    return
  }
  func.func @transform_0(%arg0: i32) -> (i32, i32, i32) {
    %c0_i32 = arith.constant 0 : i32
    %c0_i32_0 = arith.constant 0 : i32
    %c0_i32_1 = arith.constant 0 : i32
    return %c0_i32, %arg0, %c0_i32_0 : i32, i32, i32
  }
  func.func @transform_1(%arg0: i32) -> i32 {
    %c0_i32 = arith.constant 0 : i32
    %c0_i32_0 = arith.constant 0 : i32
    return %c0_i32 : i32
  }
  func.func @transform_2(%arg0: i32) -> i32 {
    %c0_i32 = arith.constant 0 : i32
    %c0_i32_0 = arith.constant 0 : i32
    return %c0_i32 : i32
  }
  func.func @transform_3(%arg0: i32) -> (i32, i32) {
    %c0_i32 = arith.constant 0 : i32
    %c0_i32_0 = arith.constant 0 : i32
    return %arg0, %c0_i32 : i32, i32
  }
}

</mosaic_0001>

<llo_original>
// kernel: tpu_custom_call.1
$region0: #{tpu_custom_call.1}
  #allocation0 [shape = 'u32[]', space=smem, size = 0x4, offset = 0x4, fixed_abs, tag = 'smem constant byte address 0x4 - core index']
  #allocation1 [shape = 'u32[72,128]{1,0:T(1,128)}', space=vmem, size = 0x9000, scoped, tag = 'internal scratch']
  #allocation2 [shape = 'f32[1]{0:T(128)S(6)}', space=smem, size = 0x200, scoped, tag = 'scoped memory for tpu_custom_call.1']
  %s0 = inlined_call_operand.hbm [shape: f32[3,1,128], index: 0, kind: input, shape index: {}]
  %s1 = inlined_call_operand.vmem [shape: f32[3], index: 1, kind: input, shape index: {}]
  %s2 = inlined_call_operand.<no memory space> [shape: f32[1], index: 2, kind: input, shape index: {}]
  %s3 = inlined_call_operand.hbm [shape: f32[1,128], index: 3, kind: output, shape index: {}]
  %s4 = sld [smem:[#allocation0]]
  $region30: #{tpu_custom_call.1} parent=0
    _
  %s6 = ssub.s32 1, %s4
  %s7 = scalar_select 0, %s6, %s4
  %8 = sst [smem:[#allocation2]] %s2
  $region1: #{tpu_custom_call.1} parent=0
    #allocation3 [shape = 'u8[1536]{0}', space=vmem, size = 0x800, scoped, tag = 'input window, operand 0, single buffered']
    #allocation4 [shape = 's32[1]{0}', space=sflag, size = 0x4, scoped, tag = 'scoped memory for tpu_custom_call.1']
    #allocation5 [shape = 's32[1]{0}', space=sflag, size = 0x4, scoped, tag = 'scoped memory for tpu_custom_call.1']
    #allocation6 [shape = 's32[1]{0}', space=sflag, size = 0x4, scoped, tag = 'scoped memory for tpu_custom_call.1']
    #allocation7 [shape = 'u8[512]{0}', space=smem, size = 0x200, scoped, tag = 'input window, operand 1, single buffered']
    #allocation8 [shape = 'u8[512]{0}', space=vmem, size = 0x400, scoped, tag = 'output window, operand 0, single buffered']
    %9 = vsyncpa [#allocation4], 0
    %10 = vsyncpa [#allocation6], 0
    %11 = vsyncpa [#allocation5], 0
    // Predicated region
    $region2: #{tpu_custom_call.1} parent=1 // pred_check
      _
    $region3: #{tpu_custom_call.1} parent=1 // pred_check_branch
      %13 = sbr.rel (0) target = $region5
    $region4: #{tpu_custom_call.1} parent=1 // pred_region
      %15 = vsyncadd [#allocation4], 0
      %s16 = sshll.u32 %s0, 4
      %s17 = int_to_ptr.hbm [resolvable:$true] %s16
      %s18 = sshll.u32 [#allocation3], 4
      %s19 = int_to_ptr.vmem [resolvable:$true] %s18
      %24 = dma.hbm_to_vmem [thread:$0]  %s17, 48, %s19, [#allocation4], 16, 16, 1
    $region5: #{tpu_custom_call.1} parent=1 // pred_fallthru
      _
    // Predicated region
    $region6: #{tpu_custom_call.1} parent=1 // pred_check
      _
    $region7: #{tpu_custom_call.1} parent=1 // pred_check_branch
      %26 = sbr.rel (0) target = $region9
    $region8: #{tpu_custom_call.1} parent=1 // pred_region
      %28 = vsyncadd [#allocation6], 0
      %s30 = sshll.u32 %s1, 4
      %s31 = int_to_ptr.vmem [resolvable:$true] %s30
      %33 = dma.vmem_to_smem %s31, 16, [#allocation7], [#allocation6]
    $region9: #{tpu_custom_call.1} parent=1 // pred_fallthru
      _
    // Predicated region
    $region10: #{tpu_custom_call.1} parent=1 // pred_check
      _
    $region11: #{tpu_custom_call.1} parent=1 // pred_check_branch
      %35 = sbr.rel (0) target = $region13
    $region12: #{tpu_custom_call.1} parent=1 // pred_region
      _
    $region13: #{tpu_custom_call.1} parent=1 // pred_fallthru
      _
    // Predicated region
    $region14: #{tpu_custom_call.1} parent=1 // pred_check
      _
    $region15: #{tpu_custom_call.1} parent=1 // pred_check_branch
      %37 = sbr.rel (0) target = $region17
    $region16: #{tpu_custom_call.1} parent=1 // pred_region
      %39 = dma.done [#allocation4], 48
    $region17: #{tpu_custom_call.1} parent=1 // pred_fallthru
      _
    // Predicated region
    $region18: #{tpu_custom_call.1} parent=1 // pred_check
      _
    $region19: #{tpu_custom_call.1} parent=1 // pred_check_branch
      %41 = sbr.rel (0) target = $region21
    $region20: #{tpu_custom_call.1} parent=1 // pred_region
      %43 = dma.done [#allocation6], 16
    $region21: #{tpu_custom_call.1} parent=1 // pred_fallthru
      _
    %44 = sfence
    %s45 = sld [smem:[#allocation7]]
    %s46 = sld [smem:[#allocation7 + $0x1]]
    %s47 = sld [smem:[#allocation7 + $0x2]]
    %s48 = sld [smem:[#allocation2]]
    %v49 = vld [vmem:[#allocation3] sm:$0x1]
    %v50 = vstv %s45
    %v51 = vmul.f32 %v50, %v49
    %s52 = scalar_lea.vmem [#allocation3], 1
    %v53 = vld [vmem:[%s52] sm:$0x1]
    %v54 = vstv %s46
    %v55 = vmul.f32 %v54, %v53
    %v56 = vadd.f32 %v51, %v55
    %s57 = scalar_lea.vmem [#allocation3], 2
    %v58 = vld [vmem:[%s57] sm:$0x1]
    %v59 = vstv %s47
    %v60 = vmul.f32 %v59, %v58
    %v61 = vadd.f32 %v56, %v60
    %v62 = vstv %s48
    %v63 = vadd.f32 %v61, %v62
    %64 = vst [vmem:[#allocation8] sm:$0x1] %v63
    // Predicated region
    $region22: #{tpu_custom_call.1} parent=1 // pred_check
      _
    $region23: #{tpu_custom_call.1} parent=1 // pred_check_branch
      %66 = sbr.rel (0) target = $region25
    $region24: #{tpu_custom_call.1} parent=1 // pred_region
      %68 = vsyncadd [#allocation5], 0
      %s70 = sshll.u32 [#allocation8], 4
      %s71 = int_to_ptr.vmem [resolvable:$true] %s70
      %s72 = sshll.u32 %s3, 4
      %s73 = int_to_ptr.hbm [resolvable:$true] %s72
      %75 = dma.vmem_to_hbm [thread:$0]  %s71, 16, %s73, [#allocation5]
    $region25: #{tpu_custom_call.1} parent=1 // pred_fallthru
      _
    // Predicated region
    $region26: #{tpu_custom_call.1} parent=1 // pred_check
      _
    $region27: #{tpu_custom_call.1} parent=1 // pred_check_branch
      %77 = sbr.rel (0) target = $region29
    $region28: #{tpu_custom_call.1} parent=1 // pred_region
      %79 = dma.done [#allocation5], 16
    $region29: #{tpu_custom_call.1} parent=1 // pred_fallthru
      _
    %80 = vsyncpa [#allocation4], 1
    %81 = vsyncpa [#allocation5], 1
    %82 = vsyncpa [#allocation6], 1

</llo_original>
